<compile_context>
chip_gen: v7x
topology: tpu7x:2x2x1
jax: 0.10.0
libtpu: 0.0.40
codegen_flags: <defaults>
</compile_context>

<pallas_src>
import jax
import jax.numpy as jnp
from jax.experimental import pallas as pl
from jax.experimental.pallas import tpu as pltpu


def _round_up(x, m):
    return (x + m - 1) // m * m


def _sigmoid(x):
    # logistic via tanh: keeps the transcendental on the EUP slot.
    return 0.5 * (jnp.tanh(0.5 * x) + 1.0)


def _vmem_limit_bytes(requested):
    """Per-generation VMEM request: ~85% of physical, at least 32 MiB if it fits."""
    try:
        phys = int(pltpu.get_tpu_info().vmem_capacity_bytes)
    except Exception:  # pragma: no cover - conservative fallback
        phys = 64 * 1024 * 1024
    cap = int(phys * 0.85)
    return int(max(min(requested, cap), min(32 * 1024 * 1024, cap)))


# --------------------------------------------------------------------------- #
# Kernel: grid = (batch_tiles, T); one LSTM-cell step per (tile, t)
# --------------------------------------------------------------------------- #
def _attention_lstm_kernel(h2_ref, v_ref, pw_ref, h0_ref, c0_ref,
                           w_h2_ref, w_v_ref, w_pw_ref, w_hh_ref, b_ref,
                           h_out_ref, c_out_ref,
                           h_sc, c_sc):
    """
    h2_ref:  (1, TB, d_lang)    w_h2_ref: (d_lang, 4*Hp)   (VMEM-resident)
    v_ref:   (1, TB, d_img)     w_v_ref:  (d_img, 4*Hp)
    pw_ref:  (1, TB, d_word)    w_pw_ref: (d_word, 4*Hp)
    h0_ref:  (TB, Hp)           w_hh_ref: (Hp, 4*Hp)
    c0_ref:  (TB, Hp)           b_ref:    (1, 4*Hp)
    h_out_ref / c_out_ref: (1, TB, Hp)   per-step outputs
    h_sc / c_sc:           (TB, Hp) f32  recurrent state carried across t
    """
    t = pl.program_id(1)

    @pl.when(t == 0)
    def _():
        h_sc[...] = h0_ref[...].astype(jnp.float32)
        c_sc[...] = c0_ref[...].astype(jnp.float32)

    w_dtype = w_hh_ref.dtype

    def mm(x, w_ref):
        # Activations are cast to the weight dtype (bf16 by default) so the MXU
        # runs natively; accumulation is always f32.
        return jnp.dot(x.astype(w_dtype), w_ref[...],
                       preferred_element_type=jnp.float32)

    gates = mm(h2_ref[0], w_h2_ref)
    gates = gates + mm(v_ref[0], w_v_ref)
    gates = gates + mm(pw_ref[0], w_pw_ref)
    gates = gates + mm(h_sc[...], w_hh_ref)
    gates = gates + b_ref[...].astype(jnp.float32)          # (TB, 4*Hp)

    hp = h_sc.shape[1]                                        # lane-aligned slab width
    i_g = _sigmoid(gates[:, 0 * hp:1 * hp])
    f_g = _sigmoid(gates[:, 1 * hp:2 * hp])
    g_g = jnp.tanh(gates[:, 2 * hp:3 * hp])
    o_g = _sigmoid(gates[:, 3 * hp:4 * hp])

    c_new = f_g * c_sc[...] + i_g * g_g
    h_new = o_g * jnp.tanh(c_new)

    c_sc[...] = c_new
    h_sc[...] = h_new
    h_out_ref[0] = h_new.astype(h_out_ref.dtype)
    c_out_ref[0] = c_new.astype(c_out_ref.dtype)


# --------------------------------------------------------------------------- #
# One-time parameter preparation (hoisted out of the per-step path)
# --------------------------------------------------------------------------- #
def prepare_attention_lstm_params(w_ih, w_hh, b_ih, b_hh,
                                  dim_lang_lstm, dim_image_feats, dim_word_emb,
                                  param_dtype=jnp.bfloat16):
    """Transpose, gate-pad (H -> Hp, multiple of 128) and split the weights.

    w_ih: (4H, D_in), w_hh: (4H, H), b_ih/b_hh: (4H,)  (PyTorch LSTMCell layout,
    with D_in ordered as [h2 | v_mean | prev_words_embedded]).
    bf16 weights (default) halve HBM weight traffic; MXU accumulation stays f32.
    """
    four_h, d_in = w_ih.shape
    hidden = four_h // 4
    assert d_in == dim_lang_lstm + dim_image_feats + dim_word_emb
    hidden_pad = _round_up(hidden, 128)

    def pad_gate_cols(w_t):
        # (rows, 4H) -> (rows, 4*Hp): each gate gets its own 128-aligned slab,
        # zero-padded in the extra columns.
        rows = w_t.shape[0]
        w4 = w_t.reshape(rows, 4, hidden)
        w4 = jnp.pad(w4, ((0, 0), (0, 0), (0, hidden_pad - hidden)))
        return w4.reshape(rows, 4 * hidden_pad)

    wih_t = pad_gate_cols(w_ih.T)                              # (D_in, 4*Hp)
    w_h2 = wih_t[:dim_lang_lstm]
    w_v = wih_t[dim_lang_lstm:dim_lang_lstm + dim_image_feats]
    w_pw = wih_t[dim_lang_lstm + dim_image_feats:]

    whh_t = pad_gate_cols(w_hh.T)                              # (H, 4*Hp)
    whh_t = jnp.pad(whh_t, ((0, hidden_pad - hidden), (0, 0)))  # rows H -> Hp

    bias = pad_gate_cols((b_ih + b_hh).reshape(1, -1)).astype(jnp.float32)

    return {
        "w_h2": w_h2.astype(param_dtype),
        "w_v": w_v.astype(param_dtype),
        "w_pw": w_pw.astype(param_dtype),
        "w_hh": whh_t.astype(param_dtype),
        "bias": bias,                       # kept f32 (added to f32 accumulator)
        "hidden": hidden,
        "hidden_pad": hidden_pad,
        "dim_lang_lstm": dim_lang_lstm,
        "dim_image_feats": dim_image_feats,
        "dim_word_emb": dim_word_emb,
    }


# --------------------------------------------------------------------------- #
# Fused multi-step forward: weights DMA'd once, h/c carried in VMEM scratch
# --------------------------------------------------------------------------- #
def attention_lstm_forward_steps(params, h1, c1, h2_seq, v_seq, pw_seq, *,
                                 block_b=None):
    """Run T LSTM-cell steps in one pallas_call.

    h2_seq / v_seq / pw_seq: (T, B, d_*)  per-step inputs.
    h1 / c1:                 (B, H)       initial state.
    Returns (h_seq, c_seq), each (T, B, H).
    """
    num_t, b = h2_seq.shape[:2]
    hidden = params["hidden"]
    hp = params["hidden_pad"]
    d_lang = params["dim_lang_lstm"]
    d_img = params["dim_image_feats"]
    d_word = params["dim_word_emb"]
    assert h1.shape == (b, hidden) and c1.shape == (b, hidden)

    if block_b is None:
        block_b = 256 if b >= 256 else 128     # 256-row tiles fill the 256x256 MXU

    # Batch tiling: multiple of 8 sublanes; prefer >= 2 tiles so the "parallel"
    # grid axis actually spans both v7x TensorCores.
    tb = min(block_b, _round_up(b, 8))
    if _round_up(b, tb) // tb == 1 and tb > 8:
        tb = _round_up(tb // 2, 8)
    bp = _round_up(b, tb)
    nb = bp // tb

    def pad2(a, rows, cols):
        return jnp.pad(a, ((0, rows - a.shape[0]), (0, cols - a.shape[1])))

    def pad3(a, rows, cols):
        return jnp.pad(a, ((0, 0), (0, rows - a.shape[1]), (0, cols - a.shape[2])))

    h1_p = pad2(h1, bp, hp)
    c1_p = pad2(c1, bp, hp)
    h2_p = pad3(h2_seq, bp, d_lang)
    v_p = pad3(v_seq, bp, d_img)
    pw_p = pad3(pw_seq, bp, d_word)

    w_h2, w_v, w_pw, w_hh, bias = (params["w_h2"], params["w_v"],
                                   params["w_pw"], params["w_hh"],
                                   params["bias"])

    grid = (nb, num_t)

    def step_in_spec(feat):
        return pl.BlockSpec((1, tb, feat), lambda i, t: (t, i, 0))

    def state_spec():
        return pl.BlockSpec((tb, hp), lambda i, t: (i, 0))

    def weight_spec(shape):
        # Constant block index + single buffer: weights are DMA'd once and stay
        # VMEM-resident; double-buffering them would waste half the VMEM.
        return pl.BlockSpec(shape, lambda i, t: (0, 0),
                            pipeline_mode=pl.Buffered(1))

    out_spec = pl.BlockSpec((1, tb, hp), lambda i, t: (t, i, 0))

    # Advisory cost estimate.
    d_in_total = d_lang + d_img + d_word + hp
    flops = 2 * num_t * bp * d_in_total * 4 * hp
    transcendentals = 5 * num_t * bp * hp
    w_bytes = sum(int(x.size) * x.dtype.itemsize for x in (w_h2, w_v, w_pw, w_hh, bias))
    act_bytes = sum(int(x.size) * x.dtype.itemsize for x in (h1_p, c1_p, h2_p, v_p, pw_p))
    out_bytes = 2 * num_t * bp * hp * jnp.dtype(h1.dtype).itemsize
    bytes_accessed = w_bytes + act_bytes + out_bytes

    # VMEM request: single-buffered resident weights + double-buffered per-step
    # activation/output tiles + state scratch + gate intermediate + slop.
    act_i = jnp.dtype(h1.dtype).itemsize
    step_in_b = tb * (d_lang + d_img + d_word) * act_i
    state_in_b = 2 * tb * hp * act_i
    out_tile_b = 2 * tb * hp * act_i
    scratch_b = 2 * tb * hp * 4
    gates_b = tb * 4 * hp * 4
    vmem_req = (w_bytes + 2 * (step_in_b + out_tile_b) + 2 * state_in_b
                + scratch_b + 2 * gates_b + (2 << 20))

    h_out_p, c_out_p = pl.pallas_call(
        _attention_lstm_kernel,
        out_shape=(
            jax.ShapeDtypeStruct((num_t, bp, hp), h1.dtype),
            jax.ShapeDtypeStruct((num_t, bp, hp), c1.dtype),
        ),
        grid=grid,
        in_specs=[
            step_in_spec(d_lang),                 # h2 sequence
            step_in_spec(d_img),                  # v_mean sequence
            step_in_spec(d_word),                 # prev_words sequence
            state_spec(),                         # h1 (initial, padded)
            state_spec(),                         # c1 (initial, padded)
            weight_spec((d_lang, 4 * hp)),        # W_ih^T rows for h2
            weight_spec((d_img, 4 * hp)),         # W_ih^T rows for v_mean
            weight_spec((d_word, 4 * hp)),        # W_ih^T rows for prev words
            weight_spec((hp, 4 * hp)),            # W_hh^T (padded)
            weight_spec((1, 4 * hp)),             # folded bias
        ],
        out_specs=(out_spec, out_spec),
        scratch_shapes=[
            pltpu.VMEM((tb, hp), jnp.float32),    # h carry
            pltpu.VMEM((tb, hp), jnp.float32),    # c carry
        ],
        compiler_params=pltpu.CompilerParams(
            dimension_semantics=("parallel", "arbitrary"),
            vmem_limit_bytes=_vmem_limit_bytes(vmem_req),
        ),
        cost_estimate=pl.CostEstimate(
            flops=int(flops),
            transcendentals=int(transcendentals),
            bytes_accessed=int(bytes_accessed),
        ),
    )(h2_p, v_p, pw_p, h1_p, c1_p, w_h2, w_v, w_pw, w_hh, bias)

    return h_out_p[:, :b, :hidden], c_out_p[:, :b, :hidden]


# --------------------------------------------------------------------------- #
# Single-step forward (module semantics): T = 1 special case of the fused kernel
# --------------------------------------------------------------------------- #
def attention_lstm_forward(params, h1, c1, h2, v_mean, prev_words_embedded, *,
                           block_b=None):
    """Pallas AttentionLSTM.forward. Returns (h_out, c_out), each (B, H)."""
    h_seq, c_seq = attention_lstm_forward_steps(
        params, h1, c1, h2[None], v_mean[None], prev_words_embedded[None],
        block_b=block_b)
    return h_seq[0], c_seq[0]


# --------------------------------------------------------------------------- #
# Pure-JAX reference of the PyTorch math
# --------------------------------------------------------------------------- #
def _reference_step(h1, c1, h2, v_mean, prev_words_embedded,
                    w_ih, w_hh, b_ih, b_hh):
    x = jnp.concatenate([h2, v_mean, prev_words_embedded], axis=1)
    gates = x @ w_ih.T + b_ih + h1 @ w_hh.T + b_hh
    hidden = h1.shape[1]
    i = jax.nn.sigmoid(gates[:, :hidden])
    f = jax.nn.sigmoid(gates[:, hidden:2 * hidden])
    g = jnp.tanh(gates[:, 2 * hidden:3 * hidden])
    o = jax.nn.sigmoid(gates[:, 3 * hidden:])
    c_out = f * c1 + i * g
    h_out = o * jnp.tanh(c_out)
    return h_out, c_out


if __name__ == "__main__":
    # Small, forward-consistent shapes.
    batch = 2
    num_steps = 4
    dim_word_emb = 32
    dim_lang_lstm = 32
    dim_image_feats = 64
    hidden_size = 32
    d_in = dim_lang_lstm + dim_image_feats + dim_word_emb  # 128

    key = jax.random.PRNGKey(0)
    ks = jax.random.split(key, 12)

    # PyTorch LSTMCell-style uniform(-1/sqrt(H), 1/sqrt(H)) init.
    bound = 1.0 / jnp.sqrt(jnp.float32(hidden_size))
    w_ih = jax.random.uniform(ks[0], (4 * hidden_size, d_in), jnp.float32, -bound, bound)
    w_hh = jax.random.uniform(ks[1], (4 * hidden_size, hidden_size), jnp.float32, -bound, bound)
    b_ih = jax.random.uniform(ks[2], (4 * hidden_size,), jnp.float32, -bound, bound)
    b_hh = jax.random.uniform(ks[3], (4 * hidden_size,), jnp.float32, -bound, bound)

    # Inputs.
    h1 = jax.random.normal(ks[4], (batch, hidden_size), jnp.float32)
    c1 = jax.random.normal(ks[5], (batch, hidden_size), jnp.float32)
    h2 = jax.random.normal(ks[6], (batch, dim_lang_lstm), jnp.float32)
    v_mean = jax.random.normal(ks[7], (batch, dim_image_feats), jnp.float32)
    prev_words = jax.random.normal(ks[8], (batch, dim_word_emb), jnp.float32)

    # ---- single step, f32 params: tight check against the PyTorch math -------
    params_f32 = prepare_attention_lstm_params(
        w_ih, w_hh, b_ih, b_hh, dim_lang_lstm, dim_image_feats, dim_word_emb,
        param_dtype=jnp.float32)
    h_out, c_out = attention_lstm_forward(params_f32, h1, c1, h2, v_mean, prev_words)
    jax.block_until_ready((h_out, c_out))
    h_ref, c_ref = _reference_step(h1, c1, h2, v_mean, prev_words, w_ih, w_hh, b_ih, b_hh)
    assert h_out.shape == (batch, hidden_size) and c_out.shape == (batch, hidden_size)
    assert jnp.allclose(h_out, h_ref, atol=1e-4, rtol=1e-4)
    assert jnp.allclose(c_out, c_ref, atol=1e-4, rtol=1e-4)

    # ---- single step, default bf16 weights: loose check ----------------------
    params_bf16 = prepare_attention_lstm_params(
        w_ih, w_hh, b_ih, b_hh, dim_lang_lstm, dim_image_feats, dim_word_emb)
    h_bf, c_bf = attention_lstm_forward(params_bf16, h1, c1, h2, v_mean, prev_words)
    jax.block_until_ready((h_bf, c_bf))
    assert jnp.allclose(h_bf, h_ref, atol=5e-2, rtol=5e-2)
    assert jnp.allclose(c_bf, c_ref, atol=5e-2, rtol=5e-2)

    # ---- fused T-step path (weights DMA'd once), f32 params: tight check -----
    h2_seq = jax.random.normal(ks[9], (num_steps, batch, dim_lang_lstm), jnp.float32)
    pw_seq = jax.random.normal(ks[10], (num_steps, batch, dim_word_emb), jnp.float32)
    v_seq = jnp.broadcast_to(v_mean, (num_steps, batch, dim_image_feats))
    h_seq, c_seq = attention_lstm_forward_steps(params_f32, h1, c1, h2_seq, v_seq, pw_seq)
    jax.block_until_ready((h_seq, c_seq))
    hr, cr = h1, c1
    for t in range(num_steps):
        hr, cr = _reference_step(hr, cr, h2_seq[t], v_seq[t], pw_seq[t],
                                 w_ih, w_hh, b_ih, b_hh)
        assert jnp.allclose(h_seq[t], hr, atol=1e-4, rtol=1e-4)
        assert jnp.allclose(c_seq[t], cr, atol=1e-4, rtol=1e-4)

    print("KERNEL_OK")
</pallas_src>

<mosaic_0001>
module attributes {stable_mosaic.version = 11 : i64} {
  func.func @_attention_lstm_kernel(%arg0: i32, %arg1: i32, %arg2: memref<1x8x32xf32, #tpu.memory_space<vmem>>, %arg3: memref<1x8x64xf32, #tpu.memory_space<vmem>>, %arg4: memref<1x8x32xf32, #tpu.memory_space<vmem>>, %arg5: memref<8x128xf32, #tpu.memory_space<vmem>>, %arg6: memref<8x128xf32, #tpu.memory_space<vmem>>, %arg7: memref<32x512xf32, #tpu.memory_space<vmem>>, %arg8: memref<64x512xf32, #tpu.memory_space<vmem>>, %arg9: memref<32x512xf32, #tpu.memory_space<vmem>>, %arg10: memref<128x512xf32, #tpu.memory_space<vmem>>, %arg11: memref<1x512xf32, #tpu.memory_space<vmem>>, %arg12: memref<1x8x128xf32, #tpu.memory_space<vmem>>, %arg13: memref<1x8x128xf32, #tpu.memory_space<vmem>>, %arg14: memref<8x128xf32, #tpu.memory_space<vmem>>, %arg15: memref<8x128xf32, #tpu.memory_space<vmem>>) attributes {dimension_semantics = [#tpu.dimension_semantics<parallel>, #tpu.dimension_semantics<arbitrary>], iteration_bounds = array<i64: 1, 1>, scalar_prefetch = 0 : i64, scratch_operands = 2 : i64, tpu.core_type = #tpu.core_type<tc>, window_params = [{transform_indices = @transform_0, window_bounds = array<i64: 1, 8, 32>}, {transform_indices = @transform_1, window_bounds = array<i64: 1, 8, 64>}, {transform_indices = @transform_2, window_bounds = array<i64: 1, 8, 32>}, {transform_indices = @transform_3, window_bounds = array<i64: 8, 128>}, {transform_indices = @transform_4, window_bounds = array<i64: 8, 128>}, {pipeline_mode = #tpu.pipeline_mode<synchronous>, transform_indices = @transform_5, window_bounds = array<i64: 32, 512>}, {pipeline_mode = #tpu.pipeline_mode<synchronous>, transform_indices = @transform_6, window_bounds = array<i64: 64, 512>}, {pipeline_mode = #tpu.pipeline_mode<synchronous>, transform_indices = @transform_7, window_bounds = array<i64: 32, 512>}, {pipeline_mode = #tpu.pipeline_mode<synchronous>, transform_indices = @transform_8, window_bounds = array<i64: 128, 512>}, {pipeline_mode = #tpu.pipeline_mode<synchronous>, transform_indices = @transform_9, window_bounds = array<i64: 1, 512>}, {transform_indices = @transform_10, window_bounds = array<i64: 1, 8, 128>}, {transform_indices = @transform_11, window_bounds = array<i64: 1, 8, 128>}]} {
    %c0_i32 = arith.constant 0 : i32
    %0 = arith.cmpi eq, %arg1, %c0_i32 : i32
    %1 = arith.extui %0 : i1 to i32
    %c0_i32_0 = arith.constant 0 : i32
    %2 = arith.cmpi ne, %1, %c0_i32_0 : i32
    scf.if %2 {
      %c0_45 = arith.constant 0 : index
      %c0_46 = arith.constant 0 : index
      %64 = vector.load %arg5[%c0_45, %c0_46] : memref<8x128xf32, #tpu.memory_space<vmem>>, vector<8x128xf32>
      %c0_47 = arith.constant 0 : index
      %c0_48 = arith.constant 0 : index
      %65 = vector.load %arg14[%c0_47, %c0_48] : memref<8x128xf32, #tpu.memory_space<vmem>>, vector<8x128xf32>
      tpu.vector_store %arg14[%c0_47, %c0_48], %64 {strides = array<i32>} : memref<8x128xf32, #tpu.memory_space<vmem>>, vector<8x128xf32>,
      %c0_49 = arith.constant 0 : index
      %c0_50 = arith.constant 0 : index
      %66 = vector.load %arg6[%c0_49, %c0_50] : memref<8x128xf32, #tpu.memory_space<vmem>>, vector<8x128xf32>
      %c0_51 = arith.constant 0 : index
      %c0_52 = arith.constant 0 : index
      %67 = vector.load %arg15[%c0_51, %c0_52] : memref<8x128xf32, #tpu.memory_space<vmem>>, vector<8x128xf32>
      tpu.vector_store %arg15[%c0_51, %c0_52], %66 {strides = array<i32>} : memref<8x128xf32, #tpu.memory_space<vmem>>, vector<8x128xf32>,
    } else {
    }
    %c0 = arith.constant 0 : index
    %c0_1 = arith.constant 0 : index
    %c0_2 = arith.constant 0 : index
    %3 = vector.load %arg2[%c0, %c0_1, %c0_2] : memref<1x8x32xf32, #tpu.memory_space<vmem>>, vector<1x8x32xf32>
    %4 = vector.shape_cast %3 : vector<1x8x32xf32> to vector<8x32xf32>
    %c0_3 = arith.constant 0 : index
    %c0_4 = arith.constant 0 : index
    %5 = vector.load %arg7[%c0_3, %c0_4] : memref<32x512xf32, #tpu.memory_space<vmem>>, vector<32x512xf32>
    %cst = arith.constant dense<0.000000e+00> : vector<8x512xf32>
    %6 = tpu.matmul %4, %5, %cst {dimension_numbers = #tpu.dot_dimension_numbers<[1], [0], [0], [1], [0, 0, 1, 1], [], []>} : vector<8x32xf32>, vector<32x512xf32>, vector<8x512xf32> -> vector<8x512xf32>
    %c0_5 = arith.constant 0 : index
    %c0_6 = arith.constant 0 : index
    %c0_7 = arith.constant 0 : index
    %7 = vector.load %arg3[%c0_5, %c0_6, %c0_7] : memref<1x8x64xf32, #tpu.memory_space<vmem>>, vector<1x8x64xf32>
    %8 = vector.shape_cast %7 : vector<1x8x64xf32> to vector<8x64xf32>
    %c0_8 = arith.constant 0 : index
    %c0_9 = arith.constant 0 : index
    %9 = vector.load %arg8[%c0_8, %c0_9] : memref<64x512xf32, #tpu.memory_space<vmem>>, vector<64x512xf32>
    %cst_10 = arith.constant dense<0.000000e+00> : vector<8x512xf32>
    %10 = tpu.matmul %8, %9, %cst_10 {dimension_numbers = #tpu.dot_dimension_numbers<[1], [0], [0], [1], [0, 0, 1, 1], [], []>} : vector<8x64xf32>, vector<64x512xf32>, vector<8x512xf32> -> vector<8x512xf32>
    %11 = arith.addf %6, %10 : vector<8x512xf32>
    %c0_11 = arith.constant 0 : index
    %c0_12 = arith.constant 0 : index
    %c0_13 = arith.constant 0 : index
    %12 = vector.load %arg4[%c0_11, %c0_12, %c0_13] : memref<1x8x32xf32, #tpu.memory_space<vmem>>, vector<1x8x32xf32>
    %13 = vector.shape_cast %12 : vector<1x8x32xf32> to vector<8x32xf32>
    %c0_14 = arith.constant 0 : index
    %c0_15 = arith.constant 0 : index
    %14 = vector.load %arg9[%c0_14, %c0_15] : memref<32x512xf32, #tpu.memory_space<vmem>>, vector<32x512xf32>
    %cst_16 = arith.constant dense<0.000000e+00> : vector<8x512xf32>
    %15 = tpu.matmul %13, %14, %cst_16 {dimension_numbers = #tpu.dot_dimension_numbers<[1], [0], [0], [1], [0, 0, 1, 1], [], []>} : vector<8x32xf32>, vector<32x512xf32>, vector<8x512xf32> -> vector<8x512xf32>
    %16 = arith.addf %11, %15 : vector<8x512xf32>
    %c0_17 = arith.constant 0 : index
    %c0_18 = arith.constant 0 : index
    %17 = vector.load %arg14[%c0_17, %c0_18] : memref<8x128xf32, #tpu.memory_space<vmem>>, vector<8x128xf32>
    %c0_19 = arith.constant 0 : index
    %c0_20 = arith.constant 0 : index
    %18 = vector.load %arg10[%c0_19, %c0_20] : memref<128x512xf32, #tpu.memory_space<vmem>>, vector<128x512xf32>
    %cst_21 = arith.constant dense<0.000000e+00> : vector<8x512xf32>
    %19 = tpu.matmul %17, %18, %cst_21 {dimension_numbers = #tpu.dot_dimension_numbers<[1], [0], [0], [1], [0, 0, 1, 1], [], []>} : vector<8x128xf32>, vector<128x512xf32>, vector<8x512xf32> -> vector<8x512xf32>
    %20 = arith.addf %16, %19 : vector<8x512xf32>
    %c0_22 = arith.constant 0 : index
    %c0_23 = arith.constant 0 : index
    %21 = vector.load %arg11[%c0_22, %c0_23] : memref<1x512xf32, #tpu.memory_space<vmem>>, vector<1x512xf32>
    %22 = vector.broadcast %21 : vector<1x512xf32> to vector<8x512xf32>
    %23 = arith.addf %20, %22 : vector<8x512xf32>
    %24 = vector.extract_strided_slice %23 {offsets = [0, 0], sizes = [8, 128], strides = [1, 1]} : vector<8x512xf32> to vector<8x128xf32>
    %cst_24 = arith.constant 5.000000e-01 : f32
    %25 = vector.broadcast %cst_24 : f32 to vector<8x128xf32>
    %26 = arith.mulf %25, %24 : vector<8x128xf32>
    %27 = math.tanh %26 : vector<8x128xf32>
    %cst_25 = arith.constant 1.000000e+00 : f32
    %28 = vector.broadcast %cst_25 : f32 to vector<8x128xf32>
    %29 = arith.addf %27, %28 : vector<8x128xf32>
    %cst_26 = arith.constant 5.000000e-01 : f32
    %30 = vector.broadcast %cst_26 : f32 to vector<8x128xf32>
    %31 = arith.mulf %30, %29 : vector<8x128xf32>
    %32 = vector.extract_strided_slice %23 {offsets = [0, 128], sizes = [8, 128], strides = [1, 1]} : vector<8x512xf32> to vector<8x128xf32>
    %cst_27 = arith.constant 5.000000e-01 : f32
    %33 = vector.broadcast %cst_27 : f32 to vector<8x128xf32>
    %34 = arith.mulf %33, %32 : vector<8x128xf32>
    %35 = math.tanh %34 : vector<8x128xf32>
    %cst_28 = arith.constant 1.000000e+00 : f32
    %36 = vector.broadcast %cst_28 : f32 to vector<8x128xf32>
    %37 = arith.addf %35, %36 : vector<8x128xf32>
    %cst_29 = arith.constant 5.000000e-01 : f32
    %38 = vector.broadcast %cst_29 : f32 to vector<8x128xf32>
    %39 = arith.mulf %38, %37 : vector<8x128xf32>
    %40 = vector.extract_strided_slice %23 {offsets = [0, 256], sizes = [8, 128], strides = [1, 1]} : vector<8x512xf32> to vector<8x128xf32>
    %41 = math.tanh %40 : vector<8x128xf32>
    %42 = vector.extract_strided_slice %23 {offsets = [0, 384], sizes = [8, 128], strides = [1, 1]} : vector<8x512xf32> to vector<8x128xf32>
    %cst_30 = arith.constant 5.000000e-01 : f32
    %43 = vector.broadcast %cst_30 : f32 to vector<8x128xf32>
    %44 = arith.mulf %43, %42 : vector<8x128xf32>
    %45 = math.tanh %44 : vector<8x128xf32>
    %cst_31 = arith.constant 1.000000e+00 : f32
    %46 = vector.broadcast %cst_31 : f32 to vector<8x128xf32>
    %47 = arith.addf %45, %46 : vector<8x128xf32>
    %cst_32 = arith.constant 5.000000e-01 : f32
    %48 = vector.broadcast %cst_32 : f32 to vector<8x128xf32>
    %49 = arith.mulf %48, %47 : vector<8x128xf32>
    %c0_33 = arith.constant 0 : index
    %c0_34 = arith.constant 0 : index
    %50 = vector.load %arg15[%c0_33, %c0_34] : memref<8x128xf32, #tpu.memory_space<vmem>>, vector<8x128xf32>
    %51 = arith.mulf %39, %50 : vector<8x128xf32>
    %52 = arith.mulf %31, %41 : vector<8x128xf32>
    %53 = arith.addf %51, %52 : vector<8x128xf32>
    %54 = math.tanh %53 : vector<8x128xf32>
    %55 = arith.mulf %49, %54 : vector<8x128xf32>
    %c0_35 = arith.constant 0 : index
    %c0_36 = arith.constant 0 : index
    %56 = vector.load %arg15[%c0_35, %c0_36] : memref<8x128xf32, #tpu.memory_space<vmem>>, vector<8x128xf32>
    tpu.vector_store %arg15[%c0_35, %c0_36], %53 {strides = array<i32>} : memref<8x128xf32, #tpu.memory_space<vmem>>, vector<8x128xf32>,
    %c0_37 = arith.constant 0 : index
    %c0_38 = arith.constant 0 : index
    %57 = vector.load %arg14[%c0_37, %c0_38] : memref<8x128xf32, #tpu.memory_space<vmem>>, vector<8x128xf32>
    tpu.vector_store %arg14[%c0_37, %c0_38], %55 {strides = array<i32>} : memref<8x128xf32, #tpu.memory_space<vmem>>, vector<8x128xf32>,
    %c0_39 = arith.constant 0 : index
    %c0_40 = arith.constant 0 : index
    %c0_41 = arith.constant 0 : index
    %58 = vector.load %arg12[%c0_39, %c0_40, %c0_41] : memref<1x8x128xf32, #tpu.memory_space<vmem>>, vector<1x8x128xf32>
    %59 = vector.shape_cast %58 : vector<1x8x128xf32> to vector<8x128xf32>
    %60 = vector.shape_cast %55 : vector<8x128xf32> to vector<1x8x128xf32>
    tpu.vector_store %arg12[%c0_39, %c0_40, %c0_41], %60 {strides = array<i32>} : memref<1x8x128xf32, #tpu.memory_space<vmem>>, vector<1x8x128xf32>,
    %c0_42 = arith.constant 0 : index
    %c0_43 = arith.constant 0 : index
    %c0_44 = arith.constant 0 : index
    %61 = vector.load %arg13[%c0_42, %c0_43, %c0_44] : memref<1x8x128xf32, #tpu.memory_space<vmem>>, vector<1x8x128xf32>
    %62 = vector.shape_cast %61 : vector<1x8x128xf32> to vector<8x128xf32>
    %63 = vector.shape_cast %53 : vector<8x128xf32> to vector<1x8x128xf32>
    tpu.vector_store %arg13[%c0_42, %c0_43, %c0_44], %63 {strides = array<i32>} : memref<1x8x128xf32, #tpu.memory_space<vmem>>, vector<1x8x128xf32>,
    return
  }
  func.func @transform_0(%arg0: i32, %arg1: i32) -> (i32, i32, i32) {
    %c0_i32 = arith.constant 0 : i32
    %c0_i32_0 = arith.constant 0 : i32
    return %arg1, %arg0, %c0_i32 : i32, i32, i32
  }
  func.func @transform_1(%arg0: i32, %arg1: i32) -> (i32, i32, i32) {
    %c0_i32 = arith.constant 0 : i32
    %c0_i32_0 = arith.constant 0 : i32
    return %arg1, %arg0, %c0_i32 : i32, i32, i32
  }
  func.func @transform_2(%arg0: i32, %arg1: i32) -> (i32, i32, i32) {
    %c0_i32 = arith.constant 0 : i32
    %c0_i32_0 = arith.constant 0 : i32
    return %arg1, %arg0, %c0_i32 : i32, i32, i32
  }
  func.func @transform_3(%arg0: i32, %arg1: i32) -> (i32, i32) {
    %c0_i32 = arith.constant 0 : i32
    %c0_i32_0 = arith.constant 0 : i32
    return %arg0, %c0_i32 : i32, i32
  }
  func.func @transform_4(%arg0: i32, %arg1: i32) -> (i32, i32) {
    %c0_i32 = arith.constant 0 : i32
    %c0_i32_0 = arith.constant 0 : i32
    return %arg0, %c0_i32 : i32, i32
  }
  func.func @transform_5(%arg0: i32, %arg1: i32) -> (i32, i32) {
    %c0_i32 = arith.constant 0 : i32
    %c0_i32_0 = arith.constant 0 : i32
    %c0_i32_1 = arith.constant 0 : i32
    return %c0_i32, %c0_i32_0 : i32, i32
  }
  func.func @transform_6(%arg0: i32, %arg1: i32) -> (i32, i32) {
    %c0_i32 = arith.constant 0 : i32
    %c0_i32_0 = arith.constant 0 : i32
    %c0_i32_1 = arith.constant 0 : i32
    return %c0_i32, %c0_i32_0 : i32, i32
  }
  func.func @transform_7(%arg0: i32, %arg1: i32) -> (i32, i32) {
    %c0_i32 = arith.constant 0 : i32
    %c0_i32_0 = arith.constant 0 : i32
    %c0_i32_1 = arith.constant 0 : i32
    return %c0_i32, %c0_i32_0 : i32, i32
  }
  func.func @transform_8(%arg0: i32, %arg1: i32) -> (i32, i32) {
    %c0_i32 = arith.constant 0 : i32
    %c0_i32_0 = arith.constant 0 : i32
    %c0_i32_1 = arith.constant 0 : i32
    return %c0_i32, %c0_i32_0 : i32, i32
  }
  func.func @transform_9(%arg0: i32, %arg1: i32) -> (i32, i32) {
    %c0_i32 = arith.constant 0 : i32
    %c0_i32_0 = arith.constant 0 : i32
    %c0_i32_1 = arith.constant 0 : i32
    return %c0_i32, %c0_i32_0 : i32, i32
  }
  func.func @transform_10(%arg0: i32, %arg1: i32) -> (i32, i32, i32) {
    %c0_i32 = arith.constant 0 : i32
    %c0_i32_0 = arith.constant 0 : i32
    return %arg1, %arg0, %c0_i32 : i32, i32, i32
  }
  func.func @transform_11(%arg0: i32, %arg1: i32) -> (i32, i32, i32) {
    %c0_i32 = arith.constant 0 : i32
    %c0_i32_0 = arith.constant 0 : i32
    return %arg1, %arg0, %c0_i32 : i32, i32, i32
  }
}

</mosaic_0001>

<llo_original>
// kernel: tpu_custom_call.1
$region0: #{tpu_custom_call.1}
  #allocation0 [shape = 'u32[]', space=smem, size = 0x4, offset = 0x4, fixed_abs, tag = 'smem constant byte address 0x4 - core index']
  #allocation1 [shape = 'u32[144,128]{1,0:T(1,128)}', space=vmem, size = 0x12000, scoped, tag = 'internal scratch']
  #allocation2 [shape = 'f32[8,128]{1,0:T(8,128)}', space=vmem, size = 0x1000, scoped, tag = 'scratch operand']
  #allocation3 [shape = 'f32[8,128]{1,0:T(8,128)}', space=vmem, size = 0x1000, scoped, tag = 'scratch operand']
  %s0 = inlined_call_operand.hbm [shape: f32[1,8,32], index: 0, kind: input, shape index: {}]
  %s1 = inlined_call_operand.hbm [shape: f32[1,8,64], index: 1, kind: input, shape index: {}]
  %s2 = inlined_call_operand.hbm [shape: f32[1,8,32], index: 2, kind: input, shape index: {}]
  %s3 = inlined_call_operand.vmem [shape: f32[8,128], index: 3, kind: input, shape index: {}]
  %s4 = inlined_call_operand.hbm [shape: f32[8,128], index: 4, kind: input, shape index: {}]
  %s5 = inlined_call_operand.hbm [shape: f32[32,512], index: 5, kind: input, shape index: {}]
  %s6 = inlined_call_operand.hbm [shape: f32[64,512], index: 6, kind: input, shape index: {}]
  %s7 = inlined_call_operand.hbm [shape: f32[32,512], index: 7, kind: input, shape index: {}]
  %s8 = inlined_call_operand.hbm [shape: f32[128,512], index: 8, kind: input, shape index: {}]
  %s9 = inlined_call_operand.vmem [shape: f32[1,512], index: 9, kind: input, shape index: {}]
  %s10 = inlined_call_operand.hbm [shape: f32[1,8,128], index: 10, kind: output, shape index: {0}]
  %s11 = inlined_call_operand.hbm [shape: f32[1,8,128], index: 11, kind: output, shape index: {1}]
  %12 = xla_tuple %s10, %s11
  %s13 = sld [smem:[#allocation0]]
  $region94: #{tpu_custom_call.1} parent=0
    _
  %s15 = ssub.s32 1, %s13
  %s16 = scalar_select 0, %s15, %s13
  $region1: #{tpu_custom_call.1} parent=0
    #allocation4 [shape = 'u8[4096]{0}', space=vmem, size = 0x1000, scoped, tag = 'input window, operand 0, single buffered']
    #allocation5 [shape = 's32[1]{0}', space=sflag, size = 0x4, scoped, tag = 'scoped memory for tpu_custom_call.1']
    #allocation6 [shape = 's32[1]{0}', space=sflag, size = 0x4, scoped, tag = 'scoped memory for tpu_custom_call.1']
    #allocation7 [shape = 'u8[4096]{0}', space=vmem, size = 0x1000, scoped, tag = 'input window, operand 1, single buffered']
    #allocation8 [shape = 's32[1]{0}', space=sflag, size = 0x4, scoped, tag = 'scoped memory for tpu_custom_call.1']
    #allocation9 [shape = 'u8[4096]{0}', space=vmem, size = 0x1000, scoped, tag = 'input window, operand 2, single buffered']
    #allocation10 [shape = 'u8[4096]{0}', space=vmem, size = 0x1000, scoped, tag = 'input window, operand 4, single buffered']
    #allocation11 [shape = 's32[1]{0}', space=sflag, size = 0x4, scoped, tag = 'scoped memory for tpu_custom_call.1']
    #allocation12 [shape = 'u8[65536]{0}', space=vmem, size = 0x10000, scoped, tag = 'input window, operand 5, single buffered']
    #allocation13 [shape = 'u8[131072]{0}', space=vmem, size = 0x20000, scoped, tag = 'input window, operand 6, single buffered']
    #allocation14 [shape = 's32[1]{0}', space=sflag, size = 0x4, scoped, tag = 'scoped memory for tpu_custom_call.1']
    #allocation15 [shape = 'u8[65536]{0}', space=vmem, size = 0x10000, scoped, tag = 'input window, operand 7, single buffered']
    #allocation16 [shape = 'u8[262144]{0}', space=vmem, size = 0x40000, scoped, tag = 'input window, operand 8, single buffered']
    #allocation17 [shape = 's32[1]{0}', space=sflag, size = 0x4, scoped, tag = 'scoped memory for tpu_custom_call.1']
    #allocation18 [shape = 'u8[4096]{0}', space=vmem, size = 0x1000, scoped, tag = 'output window, operand 0, single buffered']
    #allocation19 [shape = 'u8[4096]{0}', space=vmem, size = 0x1000, scoped, tag = 'output window, operand 1, single buffered']
    #allocation20 [shape = 's32[1]{0}', space=sflag, size = 0x4, scoped, tag = 'scoped memory for tpu_custom_call.1']
    %17 = vsyncpa [#allocation5], 0
    %18 = vsyncpa [#allocation8], 0
    %19 = vsyncpa [#allocation11], 0
    %20 = vsyncpa [#allocation14], 0
    %21 = vsyncpa [#allocation17], 0
    %22 = vsyncpa [#allocation6], 0
    %23 = vsyncpa [#allocation20], 0
    // Predicated region
    $region2: #{tpu_custom_call.1} parent=1 // pred_check
      _
    $region3: #{tpu_custom_call.1} parent=1 // pred_check_branch
      %25 = sbr.rel (0) target = $region5
    $region4: #{tpu_custom_call.1} parent=1 // pred_region
      %s27 = ssub.s32 128, 128
      %28 = vsyncadd [#allocation5], %s27
      %s30 = sshll.u32 [#allocation4], 4
      %s31 = int_to_ptr.vmem [resolvable:$true] %s30
      %33 = dma.hbm_to_vmem [thread:$0]  %s0, 128, %s31, [#allocation5]
    $region5: #{tpu_custom_call.1} parent=1 // pred_fallthru
      _
    // Predicated region
    $region6: #{tpu_custom_call.1} parent=1 // pred_check
      _
    $region7: #{tpu_custom_call.1} parent=1 // pred_check_branch
      %35 = sbr.rel (0) target = $region9
    $region8: #{tpu_custom_call.1} parent=1 // pred_region
      %s37 = ssub.s32 128, 128
      %38 = vsyncadd [#allocation8], %s37
      %s40 = sshll.u32 [#allocation7], 4
      %s41 = int_to_ptr.vmem [resolvable:$true] %s40
      %43 = dma.hbm_to_vmem [thread:$0]  %s1, 128, %s41, [#allocation8]
    $region9: #{tpu_custom_call.1} parent=1 // pred_fallthru
      _
    // Predicated region
    $region10: #{tpu_custom_call.1} parent=1 // pred_check
      _
    $region11: #{tpu_custom_call.1} parent=1 // pred_check_branch
      %45 = sbr.rel (0) target = $region13
    $region12: #{tpu_custom_call.1} parent=1 // pred_region
      %s47 = ssub.s32 128, 128
      %48 = vsyncadd [#allocation8], %s47
      %s50 = sshll.u32 [#allocation9], 4
      %s51 = int_to_ptr.vmem [resolvable:$true] %s50
      %53 = dma.hbm_to_vmem [thread:$0]  %s2, 128, %s51, [#allocation8]
    $region13: #{tpu_custom_call.1} parent=1 // pred_fallthru
      _
    // Predicated region
    $region14: #{tpu_custom_call.1} parent=1 // pred_check
      _
    $region15: #{tpu_custom_call.1} parent=1 // pred_check_branch
      %55 = sbr.rel (0) target = $region17
    $region16: #{tpu_custom_call.1} parent=1 // pred_region
      _
    $region17: #{tpu_custom_call.1} parent=1 // pred_fallthru
      _
    // Predicated region
    $region18: #{tpu_custom_call.1} parent=1 // pred_check
      _
    $region19: #{tpu_custom_call.1} parent=1 // pred_check_branch
      %57 = sbr.rel (0) target = $region21
    $region20: #{tpu_custom_call.1} parent=1 // pred_region
      %s59 = ssub.s32 128, 128
      %60 = vsyncadd [#allocation11], %s59
      %s62 = sshll.u32 [#allocation10], 4
      %s63 = int_to_ptr.vmem [resolvable:$true] %s62
      %65 = dma.hbm_to_vmem [thread:$0]  %s4, 128, %s63, [#allocation11]
    $region21: #{tpu_custom_call.1} parent=1 // pred_fallthru
      _
    // Predicated region
    $region22: #{tpu_custom_call.1} parent=1 // pred_check
      _
    $region23: #{tpu_custom_call.1} parent=1 // pred_check_branch
      %67 = sbr.rel (0) target = $region25
    $region24: #{tpu_custom_call.1} parent=1 // pred_region
      %s69 = ssub.s32 2048, 2048
      %70 = vsyncadd [#allocation11], %s69
      %s71 = sshll.u32 [#allocation12], 4
      %s72 = int_to_ptr.vmem [resolvable:$true] %s71
      %77 = dma.hbm_to_vmem [thread:$0]  %s5, 2048, %s72, [#allocation11], 512, 512, 32
    $region25: #{tpu_custom_call.1} parent=1 // pred_fallthru
      _
    // Predicated region
    $region26: #{tpu_custom_call.1} parent=1 // pred_check
      _
    $region27: #{tpu_custom_call.1} parent=1 // pred_check_branch
      %79 = sbr.rel (0) target = $region29
    $region28: #{tpu_custom_call.1} parent=1 // pred_region
      %s81 = ssub.s32 4096, 4096
      %82 = vsyncadd [#allocation14], %s81
      %s83 = sshll.u32 [#allocation13], 4
      %s84 = int_to_ptr.vmem [resolvable:$true] %s83
      %89 = dma.hbm_to_vmem [thread:$0]  %s6, 4096, %s84, [#allocation14], 512, 512, 32
    $region29: #{tpu_custom_call.1} parent=1 // pred_fallthru
      _
    // Predicated region
    $region30: #{tpu_custom_call.1} parent=1 // pred_check
      _
    $region31: #{tpu_custom_call.1} parent=1 // pred_check_branch
      %91 = sbr.rel (0) target = $region33
    $region32: #{tpu_custom_call.1} parent=1 // pred_region
      %s93 = ssub.s32 2048, 2048
      %94 = vsyncadd [#allocation14], %s93
      %s95 = sshll.u32 [#allocation15], 4
      %s96 = int_to_ptr.vmem [resolvable:$true] %s95
      %101 = dma.hbm_to_vmem [thread:$0]  %s7, 2048, %s96, [#allocation14], 512, 512, 32
    $region33: #{tpu_custom_call.1} parent=1 // pred_fallthru
      _
    // Predicated region
    $region34: #{tpu_custom_call.1} parent=1 // pred_check
      _
    $region35: #{tpu_custom_call.1} parent=1 // pred_check_branch
      %103 = sbr.rel (0) target = $region37
    $region36: #{tpu_custom_call.1} parent=1 // pred_region
      %s105 = ssub.s32 8192, 8192
      %106 = vsyncadd [#allocation17], %s105
      %s107 = sshll.u32 [#allocation16], 4
      %s108 = int_to_ptr.vmem [resolvable:$true] %s107
      %113 = dma.hbm_to_vmem [thread:$0]  %s8, 8192, %s108, [#allocation17], 512, 512, 32
    $region37: #{tpu_custom_call.1} parent=1 // pred_fallthru
      _
    // Predicated region
    $region38: #{tpu_custom_call.1} parent=1 // pred_check
      _
    $region39: #{tpu_custom_call.1} parent=1 // pred_check_branch
      %115 = sbr.rel (0) target = $region41
    $region40: #{tpu_custom_call.1} parent=1 // pred_region
      _
    $region41: #{tpu_custom_call.1} parent=1 // pred_fallthru
      _
    // Predicated region
    $region42: #{tpu_custom_call.1} parent=1 // pred_check
      _
    $region43: #{tpu_custom_call.1} parent=1 // pred_check_branch
      %117 = sbr.rel (0) target = $region45
    $region44: #{tpu_custom_call.1} parent=1 // pred_region
      %118 = dma.done [#allocation5], 128
    $region45: #{tpu_custom_call.1} parent=1 // pred_fallthru
      _
    // Predicated region
    $region46: #{tpu_custom_call.1} parent=1 // pred_check
      _
    $region47: #{tpu_custom_call.1} parent=1 // pred_check_branch
      %120 = sbr.rel (0) target = $region49
    $region48: #{tpu_custom_call.1} parent=1 // pred_region
      %121 = dma.done [#allocation8], 128
    $region49: #{tpu_custom_call.1} parent=1 // pred_fallthru
      _
    // Predicated region
    $region50: #{tpu_custom_call.1} parent=1 // pred_check
      _
    $region51: #{tpu_custom_call.1} parent=1 // pred_check_branch
      %123 = sbr.rel (0) target = $region53
    $region52: #{tpu_custom_call.1} parent=1 // pred_region
      %124 = dma.done [#allocation8], 128
    $region53: #{tpu_custom_call.1} parent=1 // pred_fallthru
      _
    // Predicated region
    $region54: #{tpu_custom_call.1} parent=1 // pred_check
      _
    $region55: #{tpu_custom_call.1} parent=1 // pred_check_branch
      %126 = sbr.rel (0) target = $region57
    $region56: #{tpu_custom_call.1} parent=1 // pred_region
      %127 = dma.done [#allocation11], 128
    $region57: #{tpu_custom_call.1} parent=1 // pred_fallthru
      _
    // Predicated region
    $region58: #{tpu_custom_call.1} parent=1 // pred_check
      _
    $region59: #{tpu_custom_call.1} parent=1 // pred_check_branch
      %129 = sbr.rel (0) target = $region61
    $region60: #{tpu_custom_call.1} parent=1 // pred_region
      %130 = dma.done [#allocation11], 2048
    $region61: #{tpu_custom_call.1} parent=1 // pred_fallthru
      _
    // Predicated region
    $region62: #{tpu_custom_call.1} parent=1 // pred_check
      _
    $region63: #{tpu_custom_call.1} parent=1 // pred_check_branch
      %132 = sbr.rel (0) target = $region65
    $region64: #{tpu_custom_call.1} parent=1 // pred_region
      %133 = dma.done [#allocation14], 4096
    $region65: #{tpu_custom_call.1} parent=1 // pred_fallthru
      _
    // Predicated region
    $region66: #{tpu_custom_call.1} parent=1 // pred_check
      _
    $region67: #{tpu_custom_call.1} parent=1 // pred_check_branch
      %135 = sbr.rel (0) target = $region69
    $region68: #{tpu_custom_call.1} parent=1 // pred_region
      %136 = dma.done [#allocation14], 2048
    $region69: #{tpu_custom_call.1} parent=1 // pred_fallthru
      _
    // Predicated region
    $region70: #{tpu_custom_call.1} parent=1 // pred_check
      _
    $region71: #{tpu_custom_call.1} parent=1 // pred_check_branch
      %138 = sbr.rel (0) target = $region73
    $region72: #{tpu_custom_call.1} parent=1 // pred_region
      %139 = dma.done [#allocation17], 8192
    $region73: #{tpu_custom_call.1} parent=1 // pred_fallthru
      _
    %p140 = scmp.eq.s32.totalorder 0, 0
    // Predicated region
    $region74: #{tpu_custom_call.1} parent=1 // pred_check
      %p141 = pneg %p140
    $region75: #{tpu_custom_call.1} parent=1 // pred_check_branch
      %143 = sbr.rel (%p141) target = $region77
    $region76: #{tpu_custom_call.1} parent=1 // pred_region
      %v144 = vld [vmem:[%s3] sm:$0xff]
      %145 = vst [vmem:[#allocation2] sm:$0xff] %v144
      %v146 = vld [vmem:[#allocation10] sm:$0xff]
      %147 = vst [vmem:[#allocation3] sm:$0xff] %v146
    $region77: #{tpu_custom_call.1} parent=1 // pred_fallthru
      _
    %v148 = vld [vmem:[#allocation4] sm:$0xff]
    %v149 = vld [vmem:[#allocation12] sm:$0xff]
    %v150 = vld [vmem:[#allocation12 + $0x8] sm:$0xff]
    %v151 = vld [vmem:[#allocation12 + $0x10] sm:$0xff]
    %v152 = vld [vmem:[#allocation12 + $0x18] sm:$0xff]
    %v153 = vld [vmem:[#allocation12 + $0x20] sm:$0xff]
    %v154 = vld [vmem:[#allocation12 + $0x28] sm:$0xff]
    %v155 = vld [vmem:[#allocation12 + $0x30] sm:$0xff]
    %v156 = vld [vmem:[#allocation12 + $0x38] sm:$0xff]
    %v157 = vld [vmem:[#allocation12 + $0x40] sm:$0xff]
    %v158 = vld [vmem:[#allocation12 + $0x48] sm:$0xff]
    %v159 = vld [vmem:[#allocation12 + $0x50] sm:$0xff]
    %v160 = vld [vmem:[#allocation12 + $0x58] sm:$0xff]
    %v161 = vld [vmem:[#allocation12 + $0x60] sm:$0xff]
    %v162 = vld [vmem:[#allocation12 + $0x68] sm:$0xff]
    %v163 = vld [vmem:[#allocation12 + $0x70] sm:$0xff]
    %v164 = vld [vmem:[#allocation12 + $0x78] sm:$0xff]
    %v165 = vld [vmem:[#allocation7] sm:$0xff]
    %v166 = vld [vmem:[#allocation13] sm:$0xff]
    %v167 = vld [vmem:[#allocation13 + $0x8] sm:$0xff]
    %v168 = vld [vmem:[#allocation13 + $0x10] sm:$0xff]
    %v169 = vld [vmem:[#allocation13 + $0x18] sm:$0xff]
    %v170 = vld [vmem:[#allocation13 + $0x20] sm:$0xff]
    %v171 = vld [vmem:[#allocation13 + $0x28] sm:$0xff]
    %v172 = vld [vmem:[#allocation13 + $0x30] sm:$0xff]
    %v173 = vld [vmem:[#allocation13 + $0x38] sm:$0xff]
    %v174 = vld [vmem:[#allocation13 + $0x40] sm:$0xff]
    %v175 = vld [vmem:[#allocation13 + $0x48] sm:$0xff]
    %v176 = vld [vmem:[#allocation13 + $0x50] sm:$0xff]
    %v177 = vld [vmem:[#allocation13 + $0x58] sm:$0xff]
    %v178 = vld [vmem:[#allocation13 + $0x60] sm:$0xff]
    %v179 = vld [vmem:[#allocation13 + $0x68] sm:$0xff]
    %v180 = vld [vmem:[#allocation13 + $0x70] sm:$0xff]
    %v181 = vld [vmem:[#allocation13 + $0x78] sm:$0xff]
    %v182 = vld [vmem:[#allocation13 + $0x80] sm:$0xff]
    %v183 = vld [vmem:[#allocation13 + $0x88] sm:$0xff]
    %v184 = vld [vmem:[#allocation13 + $0x90] sm:$0xff]
    %v185 = vld [vmem:[#allocation13 + $0x98] sm:$0xff]
    %v186 = vld [vmem:[#allocation13 + $0xa0] sm:$0xff]
    %v187 = vld [vmem:[#allocation13 + $0xa8] sm:$0xff]
    %v188 = vld [vmem:[#allocation13 + $0xb0] sm:$0xff]
    %v189 = vld [vmem:[#allocation13 + $0xb8] sm:$0xff]
    %v190 = vld [vmem:[#allocation13 + $0xc0] sm:$0xff]
    %v191 = vld [vmem:[#allocation13 + $0xc8] sm:$0xff]
    %v192 = vld [vmem:[#allocation13 + $0xd0] sm:$0xff]
    %v193 = vld [vmem:[#allocation13 + $0xd8] sm:$0xff]
    %v194 = vld [vmem:[#allocation13 + $0xe0] sm:$0xff]
    %v195 = vld [vmem:[#allocation13 + $0xe8] sm:$0xff]
    %v196 = vld [vmem:[#allocation13 + $0xf0] sm:$0xff]
    %v197 = vld [vmem:[#allocation13 + $0xf8] sm:$0xff]
    %vm198 = vcmask 523264
    %v200 = vsel %vm198, %v165, 0
    %202 = vmatprep.subr.mxu0 %v167
    %203 = vmatpush1.msra.mxu0 %v166
    %204 = vmatprep.subr.mxu0 %v171
    %205 = vmatpush1.msra.mxu0 %v170
    %206 = vmatprep.subr.mxu0 %v175
    %207 = vmatpush1.msra.mxu0 %v174
    %208 = vmatprep.subr.mxu0 %v179
    %209 = vmatpush1.msra.mxu0 %v178
    %210 = vmatprep.subr.mxu0 %v183
    %211 = vmatpush1.msra.mxu0 %v182
    %212 = vmatprep.subr.mxu0 %v187
    %213 = vmatpush1.msra.mxu0 %v186
    %214 = vmatprep.subr.mxu0 %v191
    %215 = vmatpush1.msra.mxu0 %v190
    %216 = vmatprep.subr.mxu0 %v195
    %217 = vmatpush1.msra.mxu0 %v194
    %218 = vmatprep.subr.mxu0 0.0
    %219 = vmatpush1.msra.mxu0 0.0
    %220 = vmatprep.subr.mxu0 0.0
    %221 = vmatpush1.msra.mxu0 0.0
    %222 = vmatprep.subr.mxu0 0.0
    %223 = vmatpush1.msra.mxu0 0.0
    %224 = vmatprep.subr.mxu0 0.0
    %225 = vmatpush1.msra.mxu0 0.0
    %226 = vmatprep.subr.mxu0 0.0
    %227 = vmatpush1.msra.mxu0 0.0
    %228 = vmatprep.subr.mxu0 0.0
    %229 = vmatpush1.msra.mxu0 0.0
    %230 = vmatprep.subr.mxu0 0.0
    %231 = vmatpush1.msra.mxu0 0.0
    %232 = vmatprep.subr.mxu0 0.0
    %233 = vmatpush1.msra.mxu0 0.0
    %234 = vmatprep.subr.mxu0 0.0
    %235 = vmatpush1.msra.mxu0 0.0
    %236 = vmatprep.subr.mxu0 0.0
    %237 = vmatpush1.msra.mxu0 0.0
    %238 = vmatprep.subr.mxu0 0.0
    %239 = vmatpush1.msra.mxu0 0.0
    %240 = vmatprep.subr.mxu0 0.0
    %241 = vmatpush1.msra.mxu0 0.0
    %242 = vmatprep.subr.mxu0 0.0
    %243 = vmatpush1.msra.mxu0 0.0
    %244 = vmatprep.subr.mxu0 0.0
    %245 = vmatpush1.msra.mxu0 0.0
    %246 = vmatprep.subr.mxu0 0.0
    %247 = vmatpush1.msra.mxu0 0.0
    %248 = vmatprep.subr.mxu0 0.0
    %249 = vmatpush1.msra.mxu0 0.0
    %250 = vmatprep.subr.mxu0 0.0
    %251 = vmatpush1.msra.mxu0 0.0
    %252 = vmatprep.subr.mxu0 0.0
    %253 = vmatpush1.msra.mxu0 0.0
    %254 = vmatprep.subr.mxu0 0.0
    %255 = vmatpush1.msra.mxu0 0.0
    %256 = vmatprep.subr.mxu0 0.0
    %257 = vmatpush1.msra.mxu0 0.0
    %258 = vmatprep.subr.mxu0 0.0
    %259 = vmatpush1.msra.mxu0 0.0
    %260 = vmatprep.subr.mxu0 0.0
    %261 = vmatpush1.msra.mxu0 0.0
    %262 = vmatprep.subr.mxu0 0.0
    %263 = vmatpush1.msra.mxu0 0.0
    %264 = vmatprep.subr.mxu0 0.0
    %265 = vmatpush1.msra.mxu0 0.0
    %266 = vmatprep.mubr.f32.mxu0 0.0
    %267 = vmatmul.mubr.f32.gmra.mrb[0].mxu0 %v200
    %v268 = vpop.f32.mrb[0].mxu0
    %v269 = vadd.f32 0.0, %v268
    %v270 = vpop.f32.mrb[0].mxu0
    %v271 = vadd.f32 0.0, %v270
    %272 = vdwg.mxu0
    %273 = vmatprep.subr.mxu0 %v169
    %274 = vmatpush1.msra.mxu0 %v168
    %275 = vmatprep.subr.mxu0 %v173
    %276 = vmatpush1.msra.mxu0 %v172
    %277 = vmatprep.subr.mxu0 %v177
    %278 = vmatpush1.msra.mxu0 %v176
    %279 = vmatprep.subr.mxu0 %v181
    %280 = vmatpush1.msra.mxu0 %v180
    %281 = vmatprep.subr.mxu0 %v185
    %282 = vmatpush1.msra.mxu0 %v184
    %283 = vmatprep.subr.mxu0 %v189
    %284 = vmatpush1.msra.mxu0 %v188
    %285 = vmatprep.subr.mxu0 %v193
    %286 = vmatpush1.msra.mxu0 %v192
    %287 = vmatprep.subr.mxu0 %v197
    %288 = vmatpush1.msra.mxu0 %v196
    %289 = vmatprep.subr.mxu0 0.0
    %290 = vmatpush1.msra.mxu0 0.0
    %291 = vmatprep.subr.mxu0 0.0
    %292 = vmatpush1.msra.mxu0 0.0
    %293 = vmatprep.subr.mxu0 0.0
    %294 = vmatpush1.msra.mxu0 0.0
    %295 = vmatprep.subr.mxu0 0.0
    %296 = vmatpush1.msra.mxu0 0.0
    %297 = vmatprep.subr.mxu0 0.0
    %298 = vmatpush1.msra.mxu0 0.0
    %299 = vmatprep.subr.mxu0 0.0
    %300 = vmatpush1.msra.mxu0 0.0
    %301 = vmatprep.subr.mxu0 0.0
    %302 = vmatpush1.msra.mxu0 0.0
    %303 = vmatprep.subr.mxu0 0.0
    %304 = vmatpush1.msra.mxu0 0.0
    %305 = vmatprep.subr.mxu0 0.0
    %306 = vmatpush1.msra.mxu0 0.0
    %307 = vmatprep.subr.mxu0 0.0
    %308 = vmatpush1.msra.mxu0 0.0
    %309 = vmatprep.subr.mxu0 0.0
    %310 = vmatpush1.msra.mxu0 0.0
    %311 = vmatprep.subr.mxu0 0.0
    %312 = vmatpush1.msra.mxu0 0.0
    %313 = vmatprep.subr.mxu0 0.0
    %314 = vmatpush1.msra.mxu0 0.0
    %315 = vmatprep.subr.mxu0 0.0
    %316 = vmatpush1.msra.mxu0 0.0
    %317 = vmatprep.subr.mxu0 0.0
    %318 = vmatpush1.msra.mxu0 0.0
    %319 = vmatprep.subr.mxu0 0.0
    %320 = vmatpush1.msra.mxu0 0.0
    %321 = vmatprep.subr.mxu0 0.0
    %322 = vmatpush1.msra.mxu0 0.0
    %323 = vmatprep.subr.mxu0 0.0
    %324 = vmatpush1.msra.mxu0 0.0
    %325 = vmatprep.subr.mxu0 0.0
    %326 = vmatpush1.msra.mxu0 0.0
    %327 = vmatprep.subr.mxu0 0.0
    %328 = vmatpush1.msra.mxu0 0.0
    %329 = vmatprep.subr.mxu0 0.0
    %330 = vmatpush1.msra.mxu0 0.0
    %331 = vmatprep.subr.mxu0 0.0
    %332 = vmatpush1.msra.mxu0 0.0
    %333 = vmatprep.subr.mxu0 0.0
    %334 = vmatpush1.msra.mxu0 0.0
    %335 = vmatprep.subr.mxu0 0.0
    %336 = vmatpush1.msra.mxu0 0.0
    %337 = vmatprep.mubr.f32.mxu0 0.0
    %338 = vmatmul.mubr.f32.gmra.mrb[0].mxu0 %v200
    %v339 = vpop.f32.mrb[0].mxu0
    %v340 = vadd.f32 0.0, %v339
    %v341 = vpop.f32.mrb[0].mxu0
    %v342 = vadd.f32 0.0, %v341
    %343 = vdwg.mxu0
    %vm344 = vcmask 261120
    %v346 = vsel %vm344, %v148, 0
    %348 = vmatprep.subr.mxu0 %v150
    %349 = vmatpush1.msra.mxu0 %v149
    %350 = vmatprep.subr.mxu0 %v154
    %351 = vmatpush1.msra.mxu0 %v153
    %352 = vmatprep.subr.mxu0 %v158
    %353 = vmatpush1.msra.mxu0 %v157
    %354 = vmatprep.subr.mxu0 %v162
    %355 = vmatpush1.msra.mxu0 %v161
    %356 = vmatprep.subr.mxu0 0.0
    %357 = vmatpush1.msra.mxu0 0.0
    %358 = vmatprep.subr.mxu0 0.0
    %359 = vmatpush1.msra.mxu0 0.0
    %360 = vmatprep.subr.mxu0 0.0
    %361 = vmatpush1.msra.mxu0 0.0
    %362 = vmatprep.subr.mxu0 0.0
    %363 = vmatpush1.msra.mxu0 0.0
    %364 = vmatprep.subr.mxu0 0.0
    %365 = vmatpush1.msra.mxu0 0.0
    %366 = vmatprep.subr.mxu0 0.0
    %367 = vmatpush1.msra.mxu0 0.0
    %368 = vmatprep.subr.mxu0 0.0
    %369 = vmatpush1.msra.mxu0 0.0
    %370 = vmatprep.subr.mxu0 0.0
    %371 = vmatpush1.msra.mxu0 0.0
    %372 = vmatprep.subr.mxu0 0.0
    %373 = vmatpush1.msra.mxu0 0.0
    %374 = vmatprep.subr.mxu0 0.0
    %375 = vmatpush1.msra.mxu0 0.0
    %376 = vmatprep.subr.mxu0 0.0
    %377 = vmatpush1.msra.mxu0 0.0
    %378 = vmatprep.subr.mxu0 0.0
    %379 = vmatpush1.msra.mxu0 0.0
    %380 = vmatprep.subr.mxu0 0.0
    %381 = vmatpush1.msra.mxu0 0.0
    %382 = vmatprep.subr.mxu0 0.0
    %383 = vmatpush1.msra.mxu0 0.0
    %384 = vmatprep.subr.mxu0 0.0
    %385 = vmatpush1.msra.mxu0 0.0
    %386 = vmatprep.subr.mxu0 0.0
    %387 = vmatpush1.msra.mxu0 0.0
    %388 = vmatprep.subr.mxu0 0.0
    %389 = vmatpush1.msra.mxu0 0.0
    %390 = vmatprep.subr.mxu0 0.0
    %391 = vmatpush1.msra.mxu0 0.0
    %392 = vmatprep.subr.mxu0 0.0
    %393 = vmatpush1.msra.mxu0 0.0
    %394 = vmatprep.subr.mxu0 0.0
    %395 = vmatpush1.msra.mxu0 0.0
    %396 = vmatprep.subr.mxu0 0.0
    %397 = vmatpush1.msra.mxu0 0.0
    %398 = vmatprep.subr.mxu0 0.0
    %399 = vmatpush1.msra.mxu0 0.0
    %400 = vmatprep.subr.mxu0 0.0
    %401 = vmatpush1.msra.mxu0 0.0
    %402 = vmatprep.subr.mxu0 0.0
    %403 = vmatpush1.msra.mxu0 0.0
    %404 = vmatprep.subr.mxu0 0.0
    %405 = vmatpush1.msra.mxu0 0.0
    %406 = vmatprep.subr.mxu0 0.0
    %407 = vmatpush1.msra.mxu0 0.0
    %408 = vmatprep.subr.mxu0 0.0
    %409 = vmatpush1.msra.mxu0 0.0
    %410 = vmatprep.subr.mxu0 0.0
    %411 = vmatpush1.msra.mxu0 0.0
    %412 = vmatprep.mubr.f32.mxu0 0.0
    %413 = vmatmul.mubr.f32.gmra.mrb[0].mxu0 %v346
    %v414 = vpop.f32.mrb[0].mxu0
    %v415 = vadd.f32 %v269, %v414
    %v416 = vpop.f32.mrb[0].mxu0
    %v417 = vadd.f32 %v271, %v416
    %418 = vdwg.mxu0
    %419 = vmatprep.subr.mxu0 %v152
    %420 = vmatpush1.msra.mxu0 %v151
    %421 = vmatprep.subr.mxu0 %v156
    %422 = vmatpush1.msra.mxu0 %v155
    %423 = vmatprep.subr.mxu0 %v160
    %424 = vmatpush1.msra.mxu0 %v159
    %425 = vmatprep.subr.mxu0 %v164
    %426 = vmatpush1.msra.mxu0 %v163
    %427 = vmatprep.subr.mxu0 0.0
    %428 = vmatpush1.msra.mxu0 0.0
    %429 = vmatprep.subr.mxu0 0.0
    %430 = vmatpush1.msra.mxu0 0.0
    %431 = vmatprep.subr.mxu0 0.0
    %432 = vmatpush1.msra.mxu0 0.0
    %433 = vmatprep.subr.mxu0 0.0
    %434 = vmatpush1.msra.mxu0 0.0
    %435 = vmatprep.subr.mxu0 0.0
    %436 = vmatpush1.msra.mxu0 0.0
    %437 = vmatprep.subr.mxu0 0.0
    %438 = vmatpush1.msra.mxu0 0.0
    %439 = vmatprep.subr.mxu0 0.0
    %440 = vmatpush1.msra.mxu0 0.0
    %441 = vmatprep.subr.mxu0 0.0
    %442 = vmatpush1.msra.mxu0 0.0
    %443 = vmatprep.subr.mxu0 0.0
    %444 = vmatpush1.msra.mxu0 0.0
    %445 = vmatprep.subr.mxu0 0.0
    %446 = vmatpush1.msra.mxu0 0.0
    %447 = vmatprep.subr.mxu0 0.0
    %448 = vmatpush1.msra.mxu0 0.0
    %449 = vmatprep.subr.mxu0 0.0
    %450 = vmatpush1.msra.mxu0 0.0
    %451 = vmatprep.subr.mxu0 0.0
    %452 = vmatpush1.msra.mxu0 0.0
    %453 = vmatprep.subr.mxu0 0.0
    %454 = vmatpush1.msra.mxu0 0.0
    %455 = vmatprep.subr.mxu0 0.0
    %456 = vmatpush1.msra.mxu0 0.0
    %457 = vmatprep.subr.mxu0 0.0
    %458 = vmatpush1.msra.mxu0 0.0
    %459 = vmatprep.subr.mxu0 0.0
    %460 = vmatpush1.msra.mxu0 0.0
    %461 = vmatprep.subr.mxu0 0.0
    %462 = vmatpush1.msra.mxu0 0.0
    %463 = vmatprep.subr.mxu0 0.0
    %464 = vmatpush1.msra.mxu0 0.0
    %465 = vmatprep.subr.mxu0 0.0
    %466 = vmatpush1.msra.mxu0 0.0
    %467 = vmatprep.subr.mxu0 0.0
    %468 = vmatpush1.msra.mxu0 0.0
    %469 = vmatprep.subr.mxu0 0.0
    %470 = vmatpush1.msra.mxu0 0.0
    %471 = vmatprep.subr.mxu0 0.0
    %472 = vmatpush1.msra.mxu0 0.0
    %473 = vmatprep.subr.mxu0 0.0
    %474 = vmatpush1.msra.mxu0 0.0
    %475 = vmatprep.subr.mxu0 0.0
    %476 = vmatpush1.msra.mxu0 0.0
    %477 = vmatprep.subr.mxu0 0.0
    %478 = vmatpush1.msra.mxu0 0.0
    %479 = vmatprep.subr.mxu0 0.0
    %480 = vmatpush1.msra.mxu0 0.0
    %481 = vmatprep.subr.mxu0 0.0
    %482 = vmatpush1.msra.mxu0 0.0
    %483 = vmatprep.mubr.f32.mxu0 0.0
    %484 = vmatmul.mubr.f32.gmra.mrb[0].mxu0 %v346
    %v485 = vpop.f32.mrb[0].mxu0
    %v486 = vadd.f32 %v340, %v485
    %v487 = vpop.f32.mrb[0].mxu0
    %v488 = vadd.f32 %v342, %v487
    %489 = vdwg.mxu0
    %v490 = vld [vmem:[#allocation9] sm:$0xff]
    %v491 = vld [vmem:[#allocation15] sm:$0xff]
    %v492 = vld [vmem:[#allocation15 + $0x8] sm:$0xff]
    %v493 = vld [vmem:[#allocation15 + $0x10] sm:$0xff]
    %v494 = vld [vmem:[#allocation15 + $0x18] sm:$0xff]
    %v495 = vld [vmem:[#allocation15 + $0x20] sm:$0xff]
    %v496 = vld [vmem:[#allocation15 + $0x28] sm:$0xff]
    %v497 = vld [vmem:[#allocation15 + $0x30] sm:$0xff]
    %v498 = vld [vmem:[#allocation15 + $0x38] sm:$0xff]
    %v499 = vld [vmem:[#allocation15 + $0x40] sm:$0xff]
    %v500 = vld [vmem:[#allocation15 + $0x48] sm:$0xff]
    %v501 = vld [vmem:[#allocation15 + $0x50] sm:$0xff]
    %v502 = vld [vmem:[#allocation15 + $0x58] sm:$0xff]
    %v503 = vld [vmem:[#allocation15 + $0x60] sm:$0xff]
    %v504 = vld [vmem:[#allocation15 + $0x68] sm:$0xff]
    %v505 = vld [vmem:[#allocation15 + $0x70] sm:$0xff]
    %v506 = vld [vmem:[#allocation15 + $0x78] sm:$0xff]
    %v508 = vsel %vm344, %v490, 0
    %510 = vmatprep.subr.mxu0 %v492
    %511 = vmatpush1.msra.mxu0 %v491
    %512 = vmatprep.subr.mxu0 %v496
    %513 = vmatpush1.msra.mxu0 %v495
    %514 = vmatprep.subr.mxu0 %v500
    %515 = vmatpush1.msra.mxu0 %v499
    %516 = vmatprep.subr.mxu0 %v504
    %517 = vmatpush1.msra.mxu0 %v503
    %518 = vmatprep.subr.mxu0 0.0
    %519 = vmatpush1.msra.mxu0 0.0
    %520 = vmatprep.subr.mxu0 0.0
    %521 = vmatpush1.msra.mxu0 0.0
    %522 = vmatprep.subr.mxu0 0.0
    %523 = vmatpush1.msra.mxu0 0.0
    %524 = vmatprep.subr.mxu0 0.0
    %525 = vmatpush1.msra.mxu0 0.0
    %526 = vmatprep.subr.mxu0 0.0
    %527 = vmatpush1.msra.mxu0 0.0
    %528 = vmatprep.subr.mxu0 0.0
    %529 = vmatpush1.msra.mxu0 0.0
    %530 = vmatprep.subr.mxu0 0.0
    %531 = vmatpush1.msra.mxu0 0.0
    %532 = vmatprep.subr.mxu0 0.0
    %533 = vmatpush1.msra.mxu0 0.0
    %534 = vmatprep.subr.mxu0 0.0
    %535 = vmatpush1.msra.mxu0 0.0
    %536 = vmatprep.subr.mxu0 0.0
    %537 = vmatpush1.msra.mxu0 0.0
    %538 = vmatprep.subr.mxu0 0.0
    %539 = vmatpush1.msra.mxu0 0.0
    %540 = vmatprep.subr.mxu0 0.0
    %541 = vmatpush1.msra.mxu0 0.0
    %542 = vmatprep.subr.mxu0 0.0
    %543 = vmatpush1.msra.mxu0 0.0
    %544 = vmatprep.subr.mxu0 0.0
    %545 = vmatpush1.msra.mxu0 0.0
    %546 = vmatprep.subr.mxu0 0.0
    %547 = vmatpush1.msra.mxu0 0.0
    %548 = vmatprep.subr.mxu0 0.0
    %549 = vmatpush1.msra.mxu0 0.0
    %550 = vmatprep.subr.mxu0 0.0
    %551 = vmatpush1.msra.mxu0 0.0
    %552 = vmatprep.subr.mxu0 0.0
    %553 = vmatpush1.msra.mxu0 0.0
    %554 = vmatprep.subr.mxu0 0.0
    %555 = vmatpush1.msra.mxu0 0.0
    %556 = vmatprep.subr.mxu0 0.0
    %557 = vmatpush1.msra.mxu0 0.0
    %558 = vmatprep.subr.mxu0 0.0
    %559 = vmatpush1.msra.mxu0 0.0
    %560 = vmatprep.subr.mxu0 0.0
    %561 = vmatpush1.msra.mxu0 0.0
    %562 = vmatprep.subr.mxu0 0.0
    %563 = vmatpush1.msra.mxu0 0.0
    %564 = vmatprep.subr.mxu0 0.0
    %565 = vmatpush1.msra.mxu0 0.0
    %566 = vmatprep.subr.mxu0 0.0
    %567 = vmatpush1.msra.mxu0 0.0
    %568 = vmatprep.subr.mxu0 0.0
    %569 = vmatpush1.msra.mxu0 0.0
    %570 = vmatprep.subr.mxu0 0.0
    %571 = vmatpush1.msra.mxu0 0.0
    %572 = vmatprep.subr.mxu0 0.0
    %573 = vmatpush1.msra.mxu0 0.0
    %574 = vmatprep.mubr.f32.mxu0 0.0
    %575 = vmatmul.mubr.f32.gmra.mrb[0].mxu0 %v508
    %v576 = vpop.f32.mrb[0].mxu0
    %v577 = vadd.f32 0.0, %v576
    %v578 = vpop.f32.mrb[0].mxu0
    %v579 = vadd.f32 0.0, %v578
    %580 = vdwg.mxu0
    %581 = vmatprep.subr.mxu0 %v494
    %582 = vmatpush1.msra.mxu0 %v493
    %583 = vmatprep.subr.mxu0 %v498
    %584 = vmatpush1.msra.mxu0 %v497
    %585 = vmatprep.subr.mxu0 %v502
    %586 = vmatpush1.msra.mxu0 %v501
    %587 = vmatprep.subr.mxu0 %v506
    %588 = vmatpush1.msra.mxu0 %v505
    %589 = vmatprep.subr.mxu0 0.0
    %590 = vmatpush1.msra.mxu0 0.0
    %591 = vmatprep.subr.mxu0 0.0
    %592 = vmatpush1.msra.mxu0 0.0
    %593 = vmatprep.subr.mxu0 0.0
    %594 = vmatpush1.msra.mxu0 0.0
    %595 = vmatprep.subr.mxu0 0.0
    %596 = vmatpush1.msra.mxu0 0.0
    %597 = vmatprep.subr.mxu0 0.0
    %598 = vmatpush1.msra.mxu0 0.0
    %599 = vmatprep.subr.mxu0 0.0
    %600 = vmatpush1.msra.mxu0 0.0
    %601 = vmatprep.subr.mxu0 0.0
    %602 = vmatpush1.msra.mxu0 0.0
    %603 = vmatprep.subr.mxu0 0.0
    %604 = vmatpush1.msra.mxu0 0.0
    %605 = vmatprep.subr.mxu0 0.0
    %606 = vmatpush1.msra.mxu0 0.0
    %607 = vmatprep.subr.mxu0 0.0
    %608 = vmatpush1.msra.mxu0 0.0
    %609 = vmatprep.subr.mxu0 0.0
    %610 = vmatpush1.msra.mxu0 0.0
    %611 = vmatprep.subr.mxu0 0.0
    %612 = vmatpush1.msra.mxu0 0.0
    %613 = vmatprep.subr.mxu0 0.0
    %614 = vmatpush1.msra.mxu0 0.0
    %615 = vmatprep.subr.mxu0 0.0
    %616 = vmatpush1.msra.mxu0 0.0
    %617 = vmatprep.subr.mxu0 0.0
    %618 = vmatpush1.msra.mxu0 0.0
    %619 = vmatprep.subr.mxu0 0.0
    %620 = vmatpush1.msra.mxu0 0.0
    %621 = vmatprep.subr.mxu0 0.0
    %622 = vmatpush1.msra.mxu0 0.0
    %623 = vmatprep.subr.mxu0 0.0
    %624 = vmatpush1.msra.mxu0 0.0
    %625 = vmatprep.subr.mxu0 0.0
    %626 = vmatpush1.msra.mxu0 0.0
    %627 = vmatprep.subr.mxu0 0.0
    %628 = vmatpush1.msra.mxu0 0.0
    %629 = vmatprep.subr.mxu0 0.0
    %630 = vmatpush1.msra.mxu0 0.0
    %631 = vmatprep.subr.mxu0 0.0
    %632 = vmatpush1.msra.mxu0 0.0
    %633 = vmatprep.subr.mxu0 0.0
    %634 = vmatpush1.msra.mxu0 0.0
    %635 = vmatprep.subr.mxu0 0.0
    %636 = vmatpush1.msra.mxu0 0.0
    %637 = vmatprep.subr.mxu0 0.0
    %638 = vmatpush1.msra.mxu0 0.0
    %639 = vmatprep.subr.mxu0 0.0
    %640 = vmatpush1.msra.mxu0 0.0
    %641 = vmatprep.subr.mxu0 0.0
    %642 = vmatpush1.msra.mxu0 0.0
    %643 = vmatprep.subr.mxu0 0.0
    %644 = vmatpush1.msra.mxu0 0.0
    %645 = vmatprep.mubr.f32.mxu0 0.0
    %646 = vmatmul.mubr.f32.gmra.mrb[0].mxu0 %v508
    %v647 = vpop.f32.mrb[0].mxu0
    %v648 = vadd.f32 0.0, %v647
    %v649 = vpop.f32.mrb[0].mxu0
    %v650 = vadd.f32 0.0, %v649
    %651 = vdwg.mxu0
    %v652 = vadd.f32 %v415, %v577
    %v653 = vadd.f32 %v417, %v579
    %v654 = vadd.f32 %v486, %v648
    %v655 = vadd.f32 %v488, %v650
    %v656 = vld [vmem:[#allocation2] sm:$0xff]
    %v657 = vld [vmem:[#allocation16] sm:$0xff]
    %v658 = vld [vmem:[#allocation16 + $0x8] sm:$0xff]
    %v659 = vld [vmem:[#allocation16 + $0x10] sm:$0xff]
    %v660 = vld [vmem:[#allocation16 + $0x18] sm:$0xff]
    %v661 = vld [vmem:[#allocation16 + $0x20] sm:$0xff]
    %v662 = vld [vmem:[#allocation16 + $0x28] sm:$0xff]
    %v663 = vld [vmem:[#allocation16 + $0x30] sm:$0xff]
    %v664 = vld [vmem:[#allocation16 + $0x38] sm:$0xff]
    %v665 = vld [vmem:[#allocation16 + $0x40] sm:$0xff]
    %v666 = vld [vmem:[#allocation16 + $0x48] sm:$0xff]
    %v667 = vld [vmem:[#allocation16 + $0x50] sm:$0xff]
    %v668 = vld [vmem:[#allocation16 + $0x58] sm:$0xff]
    %v669 = vld [vmem:[#allocation16 + $0x60] sm:$0xff]
    %v670 = vld [vmem:[#allocation16 + $0x68] sm:$0xff]
    %v671 = vld [vmem:[#allocation16 + $0x70] sm:$0xff]
    %v672 = vld [vmem:[#allocation16 + $0x78] sm:$0xff]
    %v673 = vld [vmem:[#allocation16 + $0x80] sm:$0xff]
    %v674 = vld [vmem:[#allocation16 + $0x88] sm:$0xff]
    %v675 = vld [vmem:[#allocation16 + $0x90] sm:$0xff]
    %v676 = vld [vmem:[#allocation16 + $0x98] sm:$0xff]
    %v677 = vld [vmem:[#allocation16 + $0xa0] sm:$0xff]
    %v678 = vld [vmem:[#allocation16 + $0xa8] sm:$0xff]
    %v679 = vld [vmem:[#allocation16 + $0xb0] sm:$0xff]
    %v680 = vld [vmem:[#allocation16 + $0xb8] sm:$0xff]
    %v681 = vld [vmem:[#allocation16 + $0xc0] sm:$0xff]
    %v682 = vld [vmem:[#allocation16 + $0xc8] sm:$0xff]
    %v683 = vld [vmem:[#allocation16 + $0xd0] sm:$0xff]
    %v684 = vld [vmem:[#allocation16 + $0xd8] sm:$0xff]
    %v685 = vld [vmem:[#allocation16 + $0xe0] sm:$0xff]
    %v686 = vld [vmem:[#allocation16 + $0xe8] sm:$0xff]
    %v687 = vld [vmem:[#allocation16 + $0xf0] sm:$0xff]
    %v688 = vld [vmem:[#allocation16 + $0xf8] sm:$0xff]
    %v689 = vld [vmem:[#allocation16 + $0x100] sm:$0xff]
    %v690 = vld [vmem:[#allocation16 + $0x108] sm:$0xff]
    %v691 = vld [vmem:[#allocation16 + $0x110] sm:$0xff]
    %v692 = vld [vmem:[#allocation16 + $0x118] sm:$0xff]
    %v693 = vld [vmem:[#allocation16 + $0x120] sm:$0xff]
    %v694 = vld [vmem:[#allocation16 + $0x128] sm:$0xff]
    %v695 = vld [vmem:[#allocation16 + $0x130] sm:$0xff]
    %v696 = vld [vmem:[#allocation16 + $0x138] sm:$0xff]
    %v697 = vld [vmem:[#allocation16 + $0x140] sm:$0xff]
    %v698 = vld [vmem:[#allocation16 + $0x148] sm:$0xff]
    %v699 = vld [vmem:[#allocation16 + $0x150] sm:$0xff]
    %v700 = vld [vmem:[#allocation16 + $0x158] sm:$0xff]
    %v701 = vld [vmem:[#allocation16 + $0x160] sm:$0xff]
    %v702 = vld [vmem:[#allocation16 + $0x168] sm:$0xff]
    %v703 = vld [vmem:[#allocation16 + $0x170] sm:$0xff]
    %v704 = vld [vmem:[#allocation16 + $0x178] sm:$0xff]
    %v705 = vld [vmem:[#allocation16 + $0x180] sm:$0xff]
    %v706 = vld [vmem:[#allocation16 + $0x188] sm:$0xff]
    %v707 = vld [vmem:[#allocation16 + $0x190] sm:$0xff]
    %v708 = vld [vmem:[#allocation16 + $0x198] sm:$0xff]
    %v709 = vld [vmem:[#allocation16 + $0x1a0] sm:$0xff]
    %v710 = vld [vmem:[#allocation16 + $0x1a8] sm:$0xff]
    %v711 = vld [vmem:[#allocation16 + $0x1b0] sm:$0xff]
    %v712 = vld [vmem:[#allocation16 + $0x1b8] sm:$0xff]
    %v713 = vld [vmem:[#allocation16 + $0x1c0] sm:$0xff]
    %v714 = vld [vmem:[#allocation16 + $0x1c8] sm:$0xff]
    %v715 = vld [vmem:[#allocation16 + $0x1d0] sm:$0xff]
    %v716 = vld [vmem:[#allocation16 + $0x1d8] sm:$0xff]
    %v717 = vld [vmem:[#allocation16 + $0x1e0] sm:$0xff]
    %v718 = vld [vmem:[#allocation16 + $0x1e8] sm:$0xff]
    %v719 = vld [vmem:[#allocation16 + $0x1f0] sm:$0xff]
    %v720 = vld [vmem:[#allocation16 + $0x1f8] sm:$0xff]
    %721 = vmatprep.subr.mxu0 %v658
    %722 = vmatpush1.msra.mxu0 %v657
    %723 = vmatprep.subr.mxu0 %v662
    %724 = vmatpush1.msra.mxu0 %v661
    %725 = vmatprep.subr.mxu0 %v666
    %726 = vmatpush1.msra.mxu0 %v665
    %727 = vmatprep.subr.mxu0 %v670
    %728 = vmatpush1.msra.mxu0 %v669
    %729 = vmatprep.subr.mxu0 %v674
    %730 = vmatpush1.msra.mxu0 %v673
    %731 = vmatprep.subr.mxu0 %v678
    %732 = vmatpush1.msra.mxu0 %v677
    %733 = vmatprep.subr.mxu0 %v682
    %734 = vmatpush1.msra.mxu0 %v681
    %735 = vmatprep.subr.mxu0 %v686
    %736 = vmatpush1.msra.mxu0 %v685
    %737 = vmatprep.subr.mxu0 %v690
    %738 = vmatpush1.msra.mxu0 %v689
    %739 = vmatprep.subr.mxu0 %v694
    %740 = vmatpush1.msra.mxu0 %v693
    %741 = vmatprep.subr.mxu0 %v698
    %742 = vmatpush1.msra.mxu0 %v697
    %743 = vmatprep.subr.mxu0 %v702
    %744 = vmatpush1.msra.mxu0 %v701
    %745 = vmatprep.subr.mxu0 %v706
    %746 = vmatpush1.msra.mxu0 %v705
    %747 = vmatprep.subr.mxu0 %v710
    %748 = vmatpush1.msra.mxu0 %v709
    %749 = vmatprep.subr.mxu0 %v714
    %750 = vmatpush1.msra.mxu0 %v713
    %751 = vmatprep.subr.mxu0 %v718
    %752 = vmatpush1.msra.mxu0 %v717
    %753 = vmatprep.subr.mxu0 0.0
    %754 = vmatpush1.msra.mxu0 0.0
    %755 = vmatprep.subr.mxu0 0.0
    %756 = vmatpush1.msra.mxu0 0.0
    %757 = vmatprep.subr.mxu0 0.0
    %758 = vmatpush1.msra.mxu0 0.0
    %759 = vmatprep.subr.mxu0 0.0
    %760 = vmatpush1.msra.mxu0 0.0
    %761 = vmatprep.subr.mxu0 0.0
    %762 = vmatpush1.msra.mxu0 0.0
    %763 = vmatprep.subr.mxu0 0.0
    %764 = vmatpush1.msra.mxu0 0.0
    %765 = vmatprep.subr.mxu0 0.0
    %766 = vmatpush1.msra.mxu0 0.0
    %767 = vmatprep.subr.mxu0 0.0
    %768 = vmatpush1.msra.mxu0 0.0
    %769 = vmatprep.subr.mxu0 0.0
    %770 = vmatpush1.msra.mxu0 0.0
    %771 = vmatprep.subr.mxu0 0.0
    %772 = vmatpush1.msra.mxu0 0.0
    %773 = vmatprep.subr.mxu0 0.0
    %774 = vmatpush1.msra.mxu0 0.0
    %775 = vmatprep.subr.mxu0 0.0
    %776 = vmatpush1.msra.mxu0 0.0
    %777 = vmatprep.subr.mxu0 0.0
    %778 = vmatpush1.msra.mxu0 0.0
    %779 = vmatprep.subr.mxu0 0.0
    %780 = vmatpush1.msra.mxu0 0.0
    %781 = vmatprep.subr.mxu0 0.0
    %782 = vmatpush1.msra.mxu0 0.0
    %783 = vmatprep.subr.mxu0 0.0
    %784 = vmatpush1.msra.mxu0 0.0
    %785 = vmatprep.mubr.f32.mxu0 0.0
    %786 = vmatmul.mubr.f32.gmra.mrb[0].mxu0 %v656
    %v787 = vpop.f32.mrb[0].mxu0
    %v788 = vadd.f32 0.0, %v787
    %v789 = vpop.f32.mrb[0].mxu0
    %v790 = vadd.f32 0.0, %v789
    %791 = vdwg.mxu0
    %792 = vmatprep.subr.mxu0 %v660
    %793 = vmatpush1.msra.mxu0 %v659
    %794 = vmatprep.subr.mxu0 %v664
    %795 = vmatpush1.msra.mxu0 %v663
    %796 = vmatprep.subr.mxu0 %v668
    %797 = vmatpush1.msra.mxu0 %v667
    %798 = vmatprep.subr.mxu0 %v672
    %799 = vmatpush1.msra.mxu0 %v671
    %800 = vmatprep.subr.mxu0 %v676
    %801 = vmatpush1.msra.mxu0 %v675
    %802 = vmatprep.subr.mxu0 %v680
    %803 = vmatpush1.msra.mxu0 %v679
    %804 = vmatprep.subr.mxu0 %v684
    %805 = vmatpush1.msra.mxu0 %v683
    %806 = vmatprep.subr.mxu0 %v688
    %807 = vmatpush1.msra.mxu0 %v687
    %808 = vmatprep.subr.mxu0 %v692
    %809 = vmatpush1.msra.mxu0 %v691
    %810 = vmatprep.subr.mxu0 %v696
    %811 = vmatpush1.msra.mxu0 %v695
    %812 = vmatprep.subr.mxu0 %v700
    %813 = vmatpush1.msra.mxu0 %v699
    %814 = vmatprep.subr.mxu0 %v704
    %815 = vmatpush1.msra.mxu0 %v703
    %816 = vmatprep.subr.mxu0 %v708
    %817 = vmatpush1.msra.mxu0 %v707
    %818 = vmatprep.subr.mxu0 %v712
    %819 = vmatpush1.msra.mxu0 %v711
    %820 = vmatprep.subr.mxu0 %v716
    %821 = vmatpush1.msra.mxu0 %v715
    %822 = vmatprep.subr.mxu0 %v720
    %823 = vmatpush1.msra.mxu0 %v719
    %824 = vmatprep.subr.mxu0 0.0
    %825 = vmatpush1.msra.mxu0 0.0
    %826 = vmatprep.subr.mxu0 0.0
    %827 = vmatpush1.msra.mxu0 0.0
    %828 = vmatprep.subr.mxu0 0.0
    %829 = vmatpush1.msra.mxu0 0.0
    %830 = vmatprep.subr.mxu0 0.0
    %831 = vmatpush1.msra.mxu0 0.0
    %832 = vmatprep.subr.mxu0 0.0
    %833 = vmatpush1.msra.mxu0 0.0
    %834 = vmatprep.subr.mxu0 0.0
    %835 = vmatpush1.msra.mxu0 0.0
    %836 = vmatprep.subr.mxu0 0.0
    %837 = vmatpush1.msra.mxu0 0.0
    %838 = vmatprep.subr.mxu0 0.0
    %839 = vmatpush1.msra.mxu0 0.0
    %840 = vmatprep.subr.mxu0 0.0
    %841 = vmatpush1.msra.mxu0 0.0
    %842 = vmatprep.subr.mxu0 0.0
    %843 = vmatpush1.msra.mxu0 0.0
    %844 = vmatprep.subr.mxu0 0.0
    %845 = vmatpush1.msra.mxu0 0.0
    %846 = vmatprep.subr.mxu0 0.0
    %847 = vmatpush1.msra.mxu0 0.0
    %848 = vmatprep.subr.mxu0 0.0
    %849 = vmatpush1.msra.mxu0 0.0
    %850 = vmatprep.subr.mxu0 0.0
    %851 = vmatpush1.msra.mxu0 0.0
    %852 = vmatprep.subr.mxu0 0.0
    %853 = vmatpush1.msra.mxu0 0.0
    %854 = vmatprep.subr.mxu0 0.0
    %855 = vmatpush1.msra.mxu0 0.0
    %856 = vmatprep.mubr.f32.mxu0 0.0
    %857 = vmatmul.mubr.f32.gmra.mrb[0].mxu0 %v656
    %v858 = vpop.f32.mrb[0].mxu0
    %v859 = vadd.f32 0.0, %v858
    %v860 = vpop.f32.mrb[0].mxu0
    %v861 = vadd.f32 0.0, %v860
    %862 = vdwg.mxu0
    %v863 = vadd.f32 %v652, %v788
    %v864 = vadd.f32 %v653, %v790
    %v865 = vadd.f32 %v654, %v859
    %v866 = vadd.f32 %v655, %v861
    %v867 = vld [vmem:[%s9] sm:$0xf]
    %v869 = vlaneseq
    %v870 = vshrl.u32 %v869, 7
    %v871 = vsub.s32 0, %v870
    %v872 = vrot.slane %v867, %v871
    %v873 = vlaneseq
    %v874 = vshrl.u32 %v873, 7
    %v875 = vsub.s32 1, %v874
    %v876 = vrot.slane %v867, %v875
    %v877 = vlaneseq
    %v878 = vshrl.u32 %v877, 7
    %v879 = vsub.s32 2, %v878
    %v880 = vrot.slane %v867, %v879
    %v881 = vlaneseq
    %v882 = vshrl.u32 %v881, 7
    %v883 = vsub.s32 3, %v882
    %v884 = vrot.slane %v867, %v883
    %v889 = vadd.f32 %v863, %v872
    %v890 = vadd.f32 %v864, %v876
    %v891 = vadd.f32 %v865, %v880
    %v892 = vadd.f32 %v866, %v884
    %v893 = vmul.f32 %v889, 0.5
    %v894 = vtanh.pop %v893
    %v895 = vadd.f32 %v894, 1.0
    %v896 = vmul.f32 %v895, 0.5
    %v897 = vmul.f32 %v890, 0.5
    %v898 = vtanh.pop %v897
    %v899 = vadd.f32 %v898, 1.0
    %v900 = vmul.f32 %v899, 0.5
    %v901 = vtanh.pop %v891
    %v902 = vmul.f32 %v892, 0.5
    %v903 = vtanh.pop %v902
    %v904 = vadd.f32 %v903, 1.0
    %v905 = vmul.f32 %v904, 0.5
    %v906 = vld [vmem:[#allocation3] sm:$0xff]
    %v907 = vmul.f32 %v900, %v906
    %v908 = vmul.f32 %v896, %v901
    %v909 = vadd.f32 %v907, %v908
    %v910 = vtanh.pop %v909
    %v911 = vmul.f32 %v905, %v910
    %912 = vst [vmem:[#allocation3] sm:$0xff] %v909
    %913 = vst [vmem:[#allocation2] sm:$0xff] %v911
    %914 = vst [vmem:[#allocation18] sm:$0xff] %v911
    %915 = vst [vmem:[#allocation19] sm:$0xff] %v909
    // Predicated region
    $region78: #{tpu_custom_call.1} parent=1 // pred_check
      _
    $region79: #{tpu_custom_call.1} parent=1 // pred_check_branch
      %917 = sbr.rel (0) target = $region81
    $region80: #{tpu_custom_call.1} parent=1 // pred_region
      %s919 = ssub.s32 128, 128
      %920 = vsyncadd [#allocation6], %s919
      %s922 = sshll.u32 [#allocation18], 4
      %s923 = int_to_ptr.vmem [resolvable:$true] %s922
      %925 = dma.vmem_to_hbm [thread:$0]  %s923, 128, %s10, [#allocation6]
    $region81: #{tpu_custom_call.1} parent=1 // pred_fallthru
      _
    // Predicated region
    $region82: #{tpu_custom_call.1} parent=1 // pred_check
      _
    $region83: #{tpu_custom_call.1} parent=1 // pred_check_branch
      %927 = sbr.rel (0) target = $region85
    $region84: #{tpu_custom_call.1} parent=1 // pred_region
      %s929 = ssub.s32 128, 128
      %930 = vsyncadd [#allocation20], %s929
      %s932 = sshll.u32 [#allocation19], 4
      %s933 = int_to_ptr.vmem [resolvable:$true] %s932
      %935 = dma.vmem_to_hbm [thread:$0]  %s933, 128, %s11, [#allocation20]
    $region85: #{tpu_custom_call.1} parent=1 // pred_fallthru
      _
    // Predicated region
    $region86: #{tpu_custom_call.1} parent=1 // pred_check
      _
    $region87: #{tpu_custom_call.1} parent=1 // pred_check_branch
      %937 = sbr.rel (0) target = $region89
    $region88: #{tpu_custom_call.1} parent=1 // pred_region
      %938 = dma.done [#allocation6], 128
    $region89: #{tpu_custom_call.1} parent=1 // pred_fallthru
      _
    // Predicated region
    $region90: #{tpu_custom_call.1} parent=1 // pred_check
      _
    $region91: #{tpu_custom_call.1} parent=1 // pred_check_branch
      %940 = sbr.rel (0) target = $region93
    $region92: #{tpu_custom_call.1} parent=1 // pred_region
      %941 = dma.done [#allocation20], 128
    $region93: #{tpu_custom_call.1} parent=1 // pred_fallthru
      _
    %942 = vsyncpa [#allocation5], 1
    %943 = vsyncpa [#allocation8], 1
    %944 = vsyncpa [#allocation11], 1
    %945 = vsyncpa [#allocation14], 1
    %946 = vsyncpa [#allocation17], 1
    %947 = vsyncpa [#allocation6], 1
    %948 = vsyncpa [#allocation20], 1

</llo_original>
